<compile_context>
chip_gen: v5e
topology: v5e:2x2
jax: 0.10.0
libtpu: 0.0.40
codegen_flags: <defaults>
</compile_context>

<pallas_src>
import functools
import math

import jax
import jax.numpy as jnp
from jax.experimental import pallas as pl
from jax.experimental.pallas import tpu as pltpu


B_PAD = 8  # sublane height: pad batch to 8 (avoids masked sublane ops / sub-8 MXU M)


# ---------------- fused Pallas kernel ----------------

def _plp_fused_kernel(scal_ref, y_ref, gt_ref, loss_ref, mean_ref, acc_ref,
                      *, batch, inv_sqrt_hw, inv_n_ws):
    # scal_ref (SMEM f32[2]): [a, steps]
    # y_ref    (VMEM bf16[B_PAD, tk]):   one K tile of the (zero-padded) noise
    # gt_ref   (VMEM bf16[tk, n_out]):   one K tile of the pre-transposed generator G^T
    # acc_ref  (VMEM f32[B_PAD, n_out]): gradient accumulator, resident across K steps
    k = pl.program_id(0)
    nk = pl.num_programs(0)

    @pl.when(k == 0)
    def _init():
        acc_ref[...] = jnp.zeros_like(acc_ref)

    # grads_partial[b, j] += sum_i y[b, i] * G[j, i]   (plain (B,tk)@(tk,n_out) on MXU)
    acc_ref[...] += jnp.dot(y_ref[...], gt_ref[...],
                            preferred_element_type=jnp.float32)

    @pl.when(k == nk - 1)
    def _finalize():
        g = acc_ref[...] * inv_sqrt_hw                             # (B_PAD, n_ws*w_dim)
        gb = g[:batch, :]                                          # valid batch rows
        # norm[b] = sqrt( mean_n( sum_d grad[b,n,d]^2 ) ) = sqrt( sum(gb[b]^2) / n_ws )
        sq = jnp.sum(gb * gb, axis=1, keepdims=True) * inv_n_ws    # (B, 1)
        norm = jnp.sqrt(sq)                                        # (B, 1)
        mean_ref[...] = jnp.mean(norm, keepdims=True)              # (1, 1)
        a = scal_ref[0]
        lv = jnp.mean((norm - a) ** 2, keepdims=True)              # (1, 1)
        loss_ref[...] = jnp.where(scal_ref[1] > 0.0, lv, jnp.zeros_like(lv))


# ---------------- wrapper (glue) ----------------

def _round_up(x, m):
    return ((x + m - 1) // m) * m


def _pick_tk(k_img, n_out, *, bytes_per_elem=2, tile_budget_bytes=16 * 1024 * 1024):
    """K tile: largest multiple of 128 whose DOUBLE-BUFFERED bf16 G tile fits the
    budget (target >= 8-16 MiB so DMA dominates the ~0.35 us fixed per-step cost;
    budget kept conservative so it also fits v7x's 64 MiB VMEM)."""
    max_tk = (tile_budget_bytes // (2 * bytes_per_elem * n_out)) // 128 * 128
    max_tk = max(max_tk, 128)
    return min(max_tk, _round_up(k_img, 128))


def prepare_generator(G, *, tk=None):
    """ONE-TIME preprocessing of the static generator weight (not per step):
    bf16 cast (halves the dominant HBM stream), transpose to (k_img, n_out) so the
    kernel needs no relayout, and zero-pad K to a multiple of tk so an awkward
    k_img can never request an over-VMEM tile."""
    n_out, k_img = G.shape
    if tk is None:
        tk = _pick_tk(k_img, n_out)
    k_pad = _round_up(k_img, tk)
    Gt = jnp.transpose(G).astype(jnp.bfloat16)                    # (k_img, n_out)
    if k_pad != k_img:
        Gt = jnp.pad(Gt, ((0, k_pad - k_img), (0, 0)))
    return Gt, tk


def path_length_penalty(w, x, Gt, tk, steps, exp_sum_a, beta, key):
    """One forward step. Returns (loss, new_steps, new_exp_sum_a)."""
    B, n_ws, w_dim = w.shape
    _, C, H, W = x.shape            # x only contributes shapes; its values do not enter the grad
    k_img = C * H * W
    n_out = n_ws * w_dim
    k_pad, gt_n = Gt.shape
    assert gt_n == n_out and k_pad % tk == 0 and k_pad >= k_img and tk % 128 == 0
    nk = k_pad // tk

    inv_sqrt_hw = 1.0 / math.sqrt(H * W)
    inv_n_ws = 1.0 / n_ws

    # y = torch.randn(x.shape) flattened; zero-pad batch to the sublane height and
    # K to the tile grid (zero rows/columns contribute nothing to the gradient).
    y = jax.random.normal(key, (B, k_img), dtype=jnp.float32)
    y_pad = jnp.zeros((B_PAD, k_pad), jnp.bfloat16).at[:B, :k_img].set(
        y.astype(jnp.bfloat16))

    # a = exp_sum_a / (1 - beta**steps); only meaningful when steps > 0 (gated in-kernel).
    denom = jnp.maximum(1.0 - jnp.power(jnp.float32(beta), steps), jnp.float32(1e-8))
    a = (exp_sum_a / denom).astype(jnp.float32)
    scal = jnp.stack([a, steps.astype(jnp.float32)])

    kernel = functools.partial(_plp_fused_kernel, batch=B,
                               inv_sqrt_hw=inv_sqrt_hw, inv_n_ws=inv_n_ws)

    cost = pl.CostEstimate(
        flops=2 * B_PAD * k_pad * n_out,
        transcendentals=B,
        bytes_accessed=2 * (k_pad * n_out + B_PAD * k_pad) + 4 * (2 + 1 + 1))

    loss, mean_norm = pl.pallas_call(
        kernel,
        out_shape=(jax.ShapeDtypeStruct((1, 1), jnp.float32),
                   jax.ShapeDtypeStruct((1, 1), jnp.float32)),
        grid=(nk,),
        in_specs=[pl.BlockSpec(memory_space=pltpu.MemorySpace.SMEM),   # [a, steps]
                  pl.BlockSpec((B_PAD, tk), lambda k: (0, k)),         # noise K tile
                  pl.BlockSpec((tk, n_out), lambda k: (k, 0))],        # G^T K tile
        out_specs=(pl.BlockSpec((1, 1), lambda k: (0, 0)),
                   pl.BlockSpec((1, 1), lambda k: (0, 0))),
        scratch_shapes=[pltpu.VMEM((B_PAD, n_out), jnp.float32)],
        compiler_params=pltpu.CompilerParams(
            # Single-core K-reduction loop; the op is HBM-bound on G.
            dimension_semantics=("arbitrary",),
            # 48 MiB is safe on v7x (64 MiB VMEM); on v5e/v6e this (and the tile
            # budget in _pick_tk) can be raised toward ~96 MiB.
            vmem_limit_bytes=48 * 1024 * 1024),
        cost_estimate=cost,
    )(scal, y_pad, Gt)

    loss = loss[0, 0]
    mean_norm = mean_norm[0, 0]

    # buffer updates: exp_sum_a.mul_(beta).add_(mean, alpha=1-beta); steps += 1
    new_exp_sum_a = exp_sum_a * beta + mean_norm * (1.0 - beta)
    new_steps = steps + 1.0
    return loss, new_steps, new_exp_sum_a


if __name__ == "__main__":
    # small shapes: w (B=2, n_ws=8, w_dim=32); x (B=2, C=4, H=16, W=16)
    B, n_ws, w_dim = 2, 8, 32
    C, H, W = 4, 16, 16
    beta = 0.99

    key = jax.random.PRNGKey(0)
    k_w, k_g, k_y0, k_y1 = jax.random.split(key, 4)

    w = jax.random.normal(k_w, (B, n_ws, w_dim), dtype=jnp.float32)
    # deterministic synthetic linear "generator" weight: x_flat = w_flat @ G
    G = jax.random.normal(k_g, (n_ws * w_dim, C * H * W), dtype=jnp.float32) * 0.02
    x = (w.reshape(B, -1) @ G).reshape(B, C, H, W)

    # one-time static-weight preprocessing (bf16 cast + transpose + K pad)
    Gt, tk = prepare_generator(G)

    # module buffers (nn.Parameter, requires_grad=False): steps=0.0, exp_sum_a=0.0
    steps = jnp.float32(0.0)
    exp_sum_a = jnp.float32(0.0)

    # step 1: steps == 0 branch -> loss = 0
    loss0, steps, exp_sum_a = path_length_penalty(w, x, Gt, tk, steps, exp_sum_a, beta, k_y0)
    # step 2: steps > 0 branch -> penalty loss
    loss1, steps, exp_sum_a = path_length_penalty(w, x, Gt, tk, steps, exp_sum_a, beta, k_y1)

    jax.block_until_ready((loss0, loss1, steps, exp_sum_a))
    assert jnp.isfinite(loss0) and jnp.isfinite(loss1)
    assert float(loss0) == 0.0
    print("KERNEL_OK")
</pallas_src>

<mosaic_0001>
module attributes {stable_mosaic.version = 11 : i64} {
  func.func @_plp_fused_kernel(%arg0: i32, %arg1: memref<2xf32, #tpu.memory_space<smem>>, %arg2: memref<8x1024xbf16, #tpu.memory_space<vmem>>, %arg3: memref<1024x256xbf16, #tpu.memory_space<vmem>>, %arg4: memref<1x1xf32, #tpu.memory_space<vmem>>, %arg5: memref<1x1xf32, #tpu.memory_space<vmem>>, %arg6: memref<8x256xf32, #tpu.memory_space<vmem>>) attributes {dimension_semantics = [#tpu.dimension_semantics<arbitrary>], iteration_bounds = array<i64: 1>, scalar_prefetch = 0 : i64, scratch_operands = 1 : i64, tpu.core_type = #tpu.core_type<tc>, window_params = [{transform_indices = @transform_0, window_bounds = array<i64: 2>}, {transform_indices = @transform_1, window_bounds = array<i64: 8, 1024>}, {transform_indices = @transform_2, window_bounds = array<i64: 1024, 256>}, {pipeline_mode = #tpu.pipeline_mode<synchronous>, transform_indices = @transform_3, window_bounds = array<i64: 1, 1>}, {pipeline_mode = #tpu.pipeline_mode<synchronous>, transform_indices = @transform_4, window_bounds = array<i64: 1, 1>}]} {
    %c0_i32 = arith.constant 0 : i32
    %0 = arith.cmpi eq, %arg0, %c0_i32 : i32
    %1 = arith.extui %0 : i1 to i32
    %c0_i32_0 = arith.constant 0 : i32
    %2 = arith.cmpi ne, %1, %c0_i32_0 : i32
    scf.if %2 {
      %cst_10 = arith.constant 0.000000e+00 : f32
      %12 = vector.broadcast %cst_10 : f32 to vector<8x256xf32>
      %c0_11 = arith.constant 0 : index
      %c0_12 = arith.constant 0 : index
      %13 = vector.load %arg6[%c0_11, %c0_12] : memref<8x256xf32, #tpu.memory_space<vmem>>, vector<8x256xf32>
      tpu.vector_store %arg6[%c0_11, %c0_12], %12 {strides = array<i32>} : memref<8x256xf32, #tpu.memory_space<vmem>>, vector<8x256xf32>,
    } else {
    }
    %c0 = arith.constant 0 : index
    %c0_1 = arith.constant 0 : index
    %3 = vector.load %arg6[%c0, %c0_1] : memref<8x256xf32, #tpu.memory_space<vmem>>, vector<8x256xf32>
    %c0_2 = arith.constant 0 : index
    %c0_3 = arith.constant 0 : index
    %4 = vector.load %arg2[%c0_2, %c0_3] : memref<8x1024xbf16, #tpu.memory_space<vmem>>, vector<8x1024xbf16>
    %c0_4 = arith.constant 0 : index
    %c0_5 = arith.constant 0 : index
    %5 = vector.load %arg3[%c0_4, %c0_5] : memref<1024x256xbf16, #tpu.memory_space<vmem>>, vector<1024x256xbf16>
    %cst = arith.constant dense<0.000000e+00> : vector<8x256xf32>
    %6 = tpu.matmul %4, %5, %cst {dimension_numbers = #tpu.dot_dimension_numbers<[1], [0], [0], [1], [0, 0, 1, 1], [], []>} : vector<8x1024xbf16>, vector<1024x256xbf16>, vector<8x256xf32> -> vector<8x256xf32>
    %7 = arith.addf %3, %6 : vector<8x256xf32>
    %c0_6 = arith.constant 0 : index
    %c0_7 = arith.constant 0 : index
    %8 = vector.load %arg6[%c0_6, %c0_7] : memref<8x256xf32, #tpu.memory_space<vmem>>, vector<8x256xf32>
    tpu.vector_store %arg6[%c0_6, %c0_7], %7 {strides = array<i32>} : memref<8x256xf32, #tpu.memory_space<vmem>>, vector<8x256xf32>,
    %c0_i32_8 = arith.constant 0 : i32
    %9 = arith.cmpi eq, %arg0, %c0_i32_8 : i32
    %10 = arith.extui %9 : i1 to i32
    %c0_i32_9 = arith.constant 0 : i32
    %11 = arith.cmpi ne, %10, %c0_i32_9 : i32
    scf.if %11 {
      %c0_10 = arith.constant 0 : index
      %c0_11 = arith.constant 0 : index
      %12 = vector.load %arg6[%c0_10, %c0_11] : memref<8x256xf32, #tpu.memory_space<vmem>>, vector<8x256xf32>
      %cst_12 = arith.constant 6.250000e-02 : f32
      %13 = vector.broadcast %cst_12 : f32 to vector<8x256xf32>
      %14 = arith.mulf %12, %13 : vector<8x256xf32>
      %15 = vector.extract_strided_slice %14 {offsets = [0, 0], sizes = [2, 256], strides = [1, 1]} : vector<8x256xf32> to vector<2x256xf32>
      %16 = arith.mulf %15, %15 : vector<2x256xf32>
      %cst_13 = arith.constant dense<0.000000e+00> : vector<2xf32>
      %17 = vector.multi_reduction <add>, %16, %cst_13 [1] : vector<2x256xf32> to vector<2xf32>
      %18 = vector.shape_cast %17 : vector<2xf32> to vector<2x1xf32>
      %cst_14 = arith.constant 1.250000e-01 : f32
      %19 = vector.broadcast %cst_14 : f32 to vector<2x1xf32>
      %20 = arith.mulf %18, %19 : vector<2x1xf32>
      %21 = math.sqrt %20 : vector<2x1xf32>
      %22 = vector.shape_cast %21 : vector<2x1xf32> to vector<1x2x1xf32>
      %cst_15 = arith.constant dense<0.000000e+00> : vector<1xf32>
      %23 = vector.multi_reduction <add>, %22, %cst_15 [1, 2] : vector<1x2x1xf32> to vector<1xf32>
      %24 = vector.shape_cast %23 : vector<1xf32> to vector<1x1x1xf32>
      %25 = vector.extract %24[0, 0, 0] : f32 from vector<1x1x1xf32>
      %26 = vector.broadcast %25 : f32 to vector<1x1xf32>
      %cst_16 = arith.constant 2.000000e+00 : f32
      %27 = vector.broadcast %cst_16 : f32 to vector<1x1xf32>
      %28 = arith.divf %26, %27 : vector<1x1xf32>
      %c0_17 = arith.constant 0 : index
      %c0_18 = arith.constant 0 : index
      %29 = vector.load %arg5[%c0_17, %c0_18] : memref<1x1xf32, #tpu.memory_space<vmem>>, vector<1x1xf32>
      tpu.vector_store %arg5[%c0_17, %c0_18], %28 {strides = array<i32>} : memref<1x1xf32, #tpu.memory_space<vmem>>, vector<1x1xf32>,
      %c0_19 = arith.constant 0 : index
      %30 = memref.load %arg1[%c0_19] : memref<2xf32, #tpu.memory_space<smem>>
      %31 = vector.broadcast %30 : f32 to vector<2x1xf32>
      %32 = arith.subf %21, %31 : vector<2x1xf32>
      %33 = arith.mulf %32, %32 : vector<2x1xf32>
      %34 = vector.shape_cast %33 : vector<2x1xf32> to vector<1x2x1xf32>
      %cst_20 = arith.constant dense<0.000000e+00> : vector<1xf32>
      %35 = vector.multi_reduction <add>, %34, %cst_20 [1, 2] : vector<1x2x1xf32> to vector<1xf32>
      %36 = vector.shape_cast %35 : vector<1xf32> to vector<1x1x1xf32>
      %37 = vector.extract %36[0, 0, 0] : f32 from vector<1x1x1xf32>
      %38 = vector.broadcast %37 : f32 to vector<1x1xf32>
      %cst_21 = arith.constant 2.000000e+00 : f32
      %39 = vector.broadcast %cst_21 : f32 to vector<1x1xf32>
      %40 = arith.divf %38, %39 : vector<1x1xf32>
      %c1 = arith.constant 1 : index
      %41 = memref.load %arg1[%c1] : memref<2xf32, #tpu.memory_space<smem>>
      %cst_22 = arith.constant 0.000000e+00 : f32
      %42 = arith.cmpf ogt, %41, %cst_22 : f32
      %cst_23 = arith.constant 0.000000e+00 : f32
      %43 = vector.broadcast %cst_23 : f32 to vector<1x1xf32>
      %44 = arith.select %42, %40, %43 : vector<1x1xf32>
      %c0_24 = arith.constant 0 : index
      %c0_25 = arith.constant 0 : index
      %45 = vector.load %arg4[%c0_24, %c0_25] : memref<1x1xf32, #tpu.memory_space<vmem>>, vector<1x1xf32>
      tpu.vector_store %arg4[%c0_24, %c0_25], %44 {strides = array<i32>} : memref<1x1xf32, #tpu.memory_space<vmem>>, vector<1x1xf32>,
    } else {
    }
    return
  }
  func.func @transform_0(%arg0: i32) -> i32 {
    %c0_i32 = arith.constant 0 : i32
    %c0_i32_0 = arith.constant 0 : i32
    return %c0_i32 : i32
  }
  func.func @transform_1(%arg0: i32) -> (i32, i32) {
    %c0_i32 = arith.constant 0 : i32
    %c0_i32_0 = arith.constant 0 : i32
    return %c0_i32, %arg0 : i32, i32
  }
  func.func @transform_2(%arg0: i32) -> (i32, i32) {
    %c0_i32 = arith.constant 0 : i32
    %c0_i32_0 = arith.constant 0 : i32
    return %arg0, %c0_i32 : i32, i32
  }
  func.func @transform_3(%arg0: i32) -> (i32, i32) {
    %c0_i32 = arith.constant 0 : i32
    %c0_i32_0 = arith.constant 0 : i32
    %c0_i32_1 = arith.constant 0 : i32
    return %c0_i32, %c0_i32_0 : i32, i32
  }
  func.func @transform_4(%arg0: i32) -> (i32, i32) {
    %c0_i32 = arith.constant 0 : i32
    %c0_i32_0 = arith.constant 0 : i32
    %c0_i32_1 = arith.constant 0 : i32
    return %c0_i32, %c0_i32_0 : i32, i32
  }
}

</mosaic_0001>

<llo_original>
// kernel: tpu_custom_call.1
$region0: #{tpu_custom_call.1}
  #allocation0 [shape = 'u32[]', space=smem, size = 0x4, offset = 0x4, fixed_abs, tag = 'smem constant byte address 0x4 - core index']
  #allocation1 [shape = 'u32[72,128]{1,0:T(1,128)}', space=vmem, size = 0x9000, scoped, tag = 'internal scratch']
  #allocation2 [shape = 'f32[8,256]{1,0:T(8,128)}', space=vmem, size = 0x2000, scoped, tag = 'scratch operand']
  %s0 = inlined_call_operand.hbm [shape: f32[2], index: 0, kind: input, shape index: {}]
  %s1 = inlined_call_operand.hbm [shape: bf16[8,1024], index: 1, kind: input, shape index: {}]
  %s2 = inlined_call_operand.hbm [shape: bf16[1024,256], index: 2, kind: input, shape index: {}]
  %s3 = inlined_call_operand.hbm [shape: f32[1,1], index: 3, kind: output, shape index: {0}]
  %s4 = inlined_call_operand.hbm [shape: f32[1,1], index: 4, kind: output, shape index: {1}]
  %5 = xla_tuple %s3, %s4
  %s6 = sld [smem:[#allocation0]]
  $region50: #{tpu_custom_call.1} parent=0
    _
  %s8 = ssub.s32 1, %s6
  %s9 = scalar_select 0, %s8, %s6
  $region1: #{tpu_custom_call.1} parent=0
    #allocation3 [shape = 'u8[512]{0}', space=smem, size = 0x200, scoped, tag = 'input window, operand 0, single buffered']
    #allocation4 [shape = 's32[1]{0}', space=sflag, size = 0x4, scoped, tag = 'scoped memory for tpu_custom_call.1']
    #allocation5 [shape = 's32[1]{0}', space=sflag, size = 0x4, scoped, tag = 'scoped memory for tpu_custom_call.1']
    #allocation6 [shape = 's32[1]{0}', space=sflag, size = 0x4, scoped, tag = 'scoped memory for tpu_custom_call.1']
    #allocation7 [shape = 'u8[16384]{0}', space=vmem, size = 0x4000, scoped, tag = 'input window, operand 1, single buffered']
    #allocation8 [shape = 'u8[524288]{0}', space=vmem, size = 0x80000, scoped, tag = 'input window, operand 2, single buffered']
    #allocation9 [shape = 's32[1]{0}', space=sflag, size = 0x4, scoped, tag = 'scoped memory for tpu_custom_call.1']
    #allocation10 [shape = 'u8[512]{0}', space=vmem, size = 0x400, scoped, tag = 'output window, operand 0, single buffered']
    #allocation11 [shape = 'u8[512]{0}', space=vmem, size = 0x400, scoped, tag = 'output window, operand 1, single buffered']
    #allocation12 [shape = 's32[1]{0}', space=sflag, size = 0x4, scoped, tag = 'scoped memory for tpu_custom_call.1']
    %10 = vsyncpa [#allocation6], 0
    %11 = vsyncpa [#allocation4], 0
    %12 = vsyncpa [#allocation9], 0
    %13 = vsyncpa [#allocation5], 0
    %14 = vsyncpa [#allocation12], 0
    // Predicated region
    $region2: #{tpu_custom_call.1} parent=1 // pred_check
      _
    $region3: #{tpu_custom_call.1} parent=1 // pred_check_branch
      %16 = sbr.rel (0) target = $region5
    $region4: #{tpu_custom_call.1} parent=1 // pred_region
      %18 = vsyncadd [#allocation6], 0
      %s20 = sshll.u32 %s0, 4
      %s21 = int_to_ptr.hbm [resolvable:$true] %s20
      %23 = dma.hbm_to_smem %s21, 16, [#allocation3], [#allocation6]
    $region5: #{tpu_custom_call.1} parent=1 // pred_fallthru
      _
    // Predicated region
    $region6: #{tpu_custom_call.1} parent=1 // pred_check
      _
    $region7: #{tpu_custom_call.1} parent=1 // pred_check_branch
      %25 = sbr.rel (0) target = $region9
    $region8: #{tpu_custom_call.1} parent=1 // pred_region
      %27 = vsyncadd [#allocation4], 0
      %s29 = sshll.u32 %s1, 4
      %s30 = int_to_ptr.hbm [resolvable:$true] %s29
      %s31 = sshll.u32 [#allocation7], 4
      %s32 = int_to_ptr.vmem [resolvable:$true] %s31
      %34 = dma.hbm_to_vmem [thread:$0]  %s30, 512, %s32, [#allocation4]
    $region9: #{tpu_custom_call.1} parent=1 // pred_fallthru
      _
    // Predicated region
    $region10: #{tpu_custom_call.1} parent=1 // pred_check
      _
    $region11: #{tpu_custom_call.1} parent=1 // pred_check_branch
      %36 = sbr.rel (0) target = $region13
    $region12: #{tpu_custom_call.1} parent=1 // pred_region
      %38 = vsyncadd [#allocation9], 0
      %s39 = sshll.u32 %s2, 4
      %s40 = int_to_ptr.hbm [resolvable:$true] %s39
      %s41 = sshll.u32 [#allocation8], 4
      %s42 = int_to_ptr.vmem [resolvable:$true] %s41
      %47 = dma.hbm_to_vmem [thread:$0]  %s40, 16384, %s42, [#allocation9], 128, 128, 8
    $region13: #{tpu_custom_call.1} parent=1 // pred_fallthru
      _
    // Predicated region
    $region14: #{tpu_custom_call.1} parent=1 // pred_check
      _
    $region15: #{tpu_custom_call.1} parent=1 // pred_check_branch
      %49 = sbr.rel (0) target = $region17
    $region16: #{tpu_custom_call.1} parent=1 // pred_region
      %51 = dma.done [#allocation6], 16
    $region17: #{tpu_custom_call.1} parent=1 // pred_fallthru
      _
    // Predicated region
    $region18: #{tpu_custom_call.1} parent=1 // pred_check
      _
    $region19: #{tpu_custom_call.1} parent=1 // pred_check_branch
      %53 = sbr.rel (0) target = $region21
    $region20: #{tpu_custom_call.1} parent=1 // pred_region
      %55 = dma.done [#allocation4], 512
    $region21: #{tpu_custom_call.1} parent=1 // pred_fallthru
      _
    // Predicated region
    $region22: #{tpu_custom_call.1} parent=1 // pred_check
      _
    $region23: #{tpu_custom_call.1} parent=1 // pred_check_branch
      %57 = sbr.rel (0) target = $region25
    $region24: #{tpu_custom_call.1} parent=1 // pred_region
      %59 = dma.done [#allocation9], 16384
    $region25: #{tpu_custom_call.1} parent=1 // pred_fallthru
      _
    %60 = sfence
    %p61 = scmp.eq.s32.totalorder 0, 0
    // Predicated region
    $region26: #{tpu_custom_call.1} parent=1 // pred_check
      %p62 = pneg %p61
    $region27: #{tpu_custom_call.1} parent=1 // pred_check_branch
      %64 = sbr.rel (%p62) target = $region29
    $region28: #{tpu_custom_call.1} parent=1 // pred_region
      %65 = vst [vmem:[#allocation2] sm:$0xff] 0.0
      %66 = vst [vmem:[#allocation2 + $0x8] sm:$0xff] 0.0
    $region29: #{tpu_custom_call.1} parent=1 // pred_fallthru
      _
    %v67 = vld [vmem:[#allocation2] sm:$0xff]
    %v68 = vld [vmem:[#allocation2 + $0x8] sm:$0xff]
    %v69 = vld [vmem:[#allocation7] sm:$0xff]
    %v70 = vld [vmem:[#allocation7 + $0x8] sm:$0xff]
    %v71 = vld [vmem:[#allocation7 + $0x10] sm:$0xff]
    %v72 = vld [vmem:[#allocation7 + $0x18] sm:$0xff]
    %v73 = vld [vmem:[#allocation8] sm:$0xff]
    %v74 = vld [vmem:[#allocation8 + $0x8] sm:$0xff]
    %v75 = vld [vmem:[#allocation8 + $0x10] sm:$0xff]
    %v76 = vld [vmem:[#allocation8 + $0x18] sm:$0xff]
    %v77 = vld [vmem:[#allocation8 + $0x20] sm:$0xff]
    %v78 = vld [vmem:[#allocation8 + $0x28] sm:$0xff]
    %v79 = vld [vmem:[#allocation8 + $0x30] sm:$0xff]
    %v80 = vld [vmem:[#allocation8 + $0x38] sm:$0xff]
    %v81 = vld [vmem:[#allocation8 + $0x40] sm:$0xff]
    %v82 = vld [vmem:[#allocation8 + $0x48] sm:$0xff]
    %v83 = vld [vmem:[#allocation8 + $0x50] sm:$0xff]
    %v84 = vld [vmem:[#allocation8 + $0x58] sm:$0xff]
    %v85 = vld [vmem:[#allocation8 + $0x60] sm:$0xff]
    %v86 = vld [vmem:[#allocation8 + $0x68] sm:$0xff]
    %v87 = vld [vmem:[#allocation8 + $0x70] sm:$0xff]
    %v88 = vld [vmem:[#allocation8 + $0x78] sm:$0xff]
    %v89 = vld [vmem:[#allocation8 + $0x80] sm:$0xff]
    %v90 = vld [vmem:[#allocation8 + $0x88] sm:$0xff]
    %v91 = vld [vmem:[#allocation8 + $0x90] sm:$0xff]
    %v92 = vld [vmem:[#allocation8 + $0x98] sm:$0xff]
    %v93 = vld [vmem:[#allocation8 + $0xa0] sm:$0xff]
    %v94 = vld [vmem:[#allocation8 + $0xa8] sm:$0xff]
    %v95 = vld [vmem:[#allocation8 + $0xb0] sm:$0xff]
    %v96 = vld [vmem:[#allocation8 + $0xb8] sm:$0xff]
    %v97 = vld [vmem:[#allocation8 + $0xc0] sm:$0xff]
    %v98 = vld [vmem:[#allocation8 + $0xc8] sm:$0xff]
    %v99 = vld [vmem:[#allocation8 + $0xd0] sm:$0xff]
    %v100 = vld [vmem:[#allocation8 + $0xd8] sm:$0xff]
    %v101 = vld [vmem:[#allocation8 + $0xe0] sm:$0xff]
    %v102 = vld [vmem:[#allocation8 + $0xe8] sm:$0xff]
    %v103 = vld [vmem:[#allocation8 + $0xf0] sm:$0xff]
    %v104 = vld [vmem:[#allocation8 + $0xf8] sm:$0xff]
    %v105 = vld [vmem:[#allocation8 + $0x100] sm:$0xff]
    %v106 = vld [vmem:[#allocation8 + $0x108] sm:$0xff]
    %v107 = vld [vmem:[#allocation8 + $0x110] sm:$0xff]
    %v108 = vld [vmem:[#allocation8 + $0x118] sm:$0xff]
    %v109 = vld [vmem:[#allocation8 + $0x120] sm:$0xff]
    %v110 = vld [vmem:[#allocation8 + $0x128] sm:$0xff]
    %v111 = vld [vmem:[#allocation8 + $0x130] sm:$0xff]
    %v112 = vld [vmem:[#allocation8 + $0x138] sm:$0xff]
    %v113 = vld [vmem:[#allocation8 + $0x140] sm:$0xff]
    %v114 = vld [vmem:[#allocation8 + $0x148] sm:$0xff]
    %v115 = vld [vmem:[#allocation8 + $0x150] sm:$0xff]
    %v116 = vld [vmem:[#allocation8 + $0x158] sm:$0xff]
    %v117 = vld [vmem:[#allocation8 + $0x160] sm:$0xff]
    %v118 = vld [vmem:[#allocation8 + $0x168] sm:$0xff]
    %v119 = vld [vmem:[#allocation8 + $0x170] sm:$0xff]
    %v120 = vld [vmem:[#allocation8 + $0x178] sm:$0xff]
    %v121 = vld [vmem:[#allocation8 + $0x180] sm:$0xff]
    %v122 = vld [vmem:[#allocation8 + $0x188] sm:$0xff]
    %v123 = vld [vmem:[#allocation8 + $0x190] sm:$0xff]
    %v124 = vld [vmem:[#allocation8 + $0x198] sm:$0xff]
    %v125 = vld [vmem:[#allocation8 + $0x1a0] sm:$0xff]
    %v126 = vld [vmem:[#allocation8 + $0x1a8] sm:$0xff]
    %v127 = vld [vmem:[#allocation8 + $0x1b0] sm:$0xff]
    %v128 = vld [vmem:[#allocation8 + $0x1b8] sm:$0xff]
    %v129 = vld [vmem:[#allocation8 + $0x1c0] sm:$0xff]
    %v130 = vld [vmem:[#allocation8 + $0x1c8] sm:$0xff]
    %v131 = vld [vmem:[#allocation8 + $0x1d0] sm:$0xff]
    %v132 = vld [vmem:[#allocation8 + $0x1d8] sm:$0xff]
    %v133 = vld [vmem:[#allocation8 + $0x1e0] sm:$0xff]
    %v134 = vld [vmem:[#allocation8 + $0x1e8] sm:$0xff]
    %v135 = vld [vmem:[#allocation8 + $0x1f0] sm:$0xff]
    %v136 = vld [vmem:[#allocation8 + $0x1f8] sm:$0xff]
    %v137 = vld [vmem:[#allocation8 + $0x200] sm:$0xff]
    %v138 = vld [vmem:[#allocation8 + $0x208] sm:$0xff]
    %v139 = vld [vmem:[#allocation8 + $0x210] sm:$0xff]
    %v140 = vld [vmem:[#allocation8 + $0x218] sm:$0xff]
    %v141 = vld [vmem:[#allocation8 + $0x220] sm:$0xff]
    %v142 = vld [vmem:[#allocation8 + $0x228] sm:$0xff]
    %v143 = vld [vmem:[#allocation8 + $0x230] sm:$0xff]
    %v144 = vld [vmem:[#allocation8 + $0x238] sm:$0xff]
    %v145 = vld [vmem:[#allocation8 + $0x240] sm:$0xff]
    %v146 = vld [vmem:[#allocation8 + $0x248] sm:$0xff]
    %v147 = vld [vmem:[#allocation8 + $0x250] sm:$0xff]
    %v148 = vld [vmem:[#allocation8 + $0x258] sm:$0xff]
    %v149 = vld [vmem:[#allocation8 + $0x260] sm:$0xff]
    %v150 = vld [vmem:[#allocation8 + $0x268] sm:$0xff]
    %v151 = vld [vmem:[#allocation8 + $0x270] sm:$0xff]
    %v152 = vld [vmem:[#allocation8 + $0x278] sm:$0xff]
    %v153 = vld [vmem:[#allocation8 + $0x280] sm:$0xff]
    %v154 = vld [vmem:[#allocation8 + $0x288] sm:$0xff]
    %v155 = vld [vmem:[#allocation8 + $0x290] sm:$0xff]
    %v156 = vld [vmem:[#allocation8 + $0x298] sm:$0xff]
    %v157 = vld [vmem:[#allocation8 + $0x2a0] sm:$0xff]
    %v158 = vld [vmem:[#allocation8 + $0x2a8] sm:$0xff]
    %v159 = vld [vmem:[#allocation8 + $0x2b0] sm:$0xff]
    %v160 = vld [vmem:[#allocation8 + $0x2b8] sm:$0xff]
    %v161 = vld [vmem:[#allocation8 + $0x2c0] sm:$0xff]
    %v162 = vld [vmem:[#allocation8 + $0x2c8] sm:$0xff]
    %v163 = vld [vmem:[#allocation8 + $0x2d0] sm:$0xff]
    %v164 = vld [vmem:[#allocation8 + $0x2d8] sm:$0xff]
    %v165 = vld [vmem:[#allocation8 + $0x2e0] sm:$0xff]
    %v166 = vld [vmem:[#allocation8 + $0x2e8] sm:$0xff]
    %v167 = vld [vmem:[#allocation8 + $0x2f0] sm:$0xff]
    %v168 = vld [vmem:[#allocation8 + $0x2f8] sm:$0xff]
    %v169 = vld [vmem:[#allocation8 + $0x300] sm:$0xff]
    %v170 = vld [vmem:[#allocation8 + $0x308] sm:$0xff]
    %v171 = vld [vmem:[#allocation8 + $0x310] sm:$0xff]
    %v172 = vld [vmem:[#allocation8 + $0x318] sm:$0xff]
    %v173 = vld [vmem:[#allocation8 + $0x320] sm:$0xff]
    %v174 = vld [vmem:[#allocation8 + $0x328] sm:$0xff]
    %v175 = vld [vmem:[#allocation8 + $0x330] sm:$0xff]
    %v176 = vld [vmem:[#allocation8 + $0x338] sm:$0xff]
    %v177 = vld [vmem:[#allocation8 + $0x340] sm:$0xff]
    %v178 = vld [vmem:[#allocation8 + $0x348] sm:$0xff]
    %v179 = vld [vmem:[#allocation8 + $0x350] sm:$0xff]
    %v180 = vld [vmem:[#allocation8 + $0x358] sm:$0xff]
    %v181 = vld [vmem:[#allocation8 + $0x360] sm:$0xff]
    %v182 = vld [vmem:[#allocation8 + $0x368] sm:$0xff]
    %v183 = vld [vmem:[#allocation8 + $0x370] sm:$0xff]
    %v184 = vld [vmem:[#allocation8 + $0x378] sm:$0xff]
    %v185 = vld [vmem:[#allocation8 + $0x380] sm:$0xff]
    %v186 = vld [vmem:[#allocation8 + $0x388] sm:$0xff]
    %v187 = vld [vmem:[#allocation8 + $0x390] sm:$0xff]
    %v188 = vld [vmem:[#allocation8 + $0x398] sm:$0xff]
    %v189 = vld [vmem:[#allocation8 + $0x3a0] sm:$0xff]
    %v190 = vld [vmem:[#allocation8 + $0x3a8] sm:$0xff]
    %v191 = vld [vmem:[#allocation8 + $0x3b0] sm:$0xff]
    %v192 = vld [vmem:[#allocation8 + $0x3b8] sm:$0xff]
    %v193 = vld [vmem:[#allocation8 + $0x3c0] sm:$0xff]
    %v194 = vld [vmem:[#allocation8 + $0x3c8] sm:$0xff]
    %v195 = vld [vmem:[#allocation8 + $0x3d0] sm:$0xff]
    %v196 = vld [vmem:[#allocation8 + $0x3d8] sm:$0xff]
    %v197 = vld [vmem:[#allocation8 + $0x3e0] sm:$0xff]
    %v198 = vld [vmem:[#allocation8 + $0x3e8] sm:$0xff]
    %v199 = vld [vmem:[#allocation8 + $0x3f0] sm:$0xff]
    %v200 = vld [vmem:[#allocation8 + $0x3f8] sm:$0xff]
    %v205 = vunpack.c.l.b16 %v69
    %v206 = vunpack.c.h.b16 %v69
    %v207 = vunpack.c.l.b16 %v70
    %v208 = vunpack.c.h.b16 %v70
    %v209 = vunpack.c.l.b16 %v71
    %v210 = vunpack.c.h.b16 %v71
    %v211 = vunpack.c.l.b16 %v72
    %v212 = vunpack.c.h.b16 %v72
    %v213 = vpack.c.b16 %v205, %v205
    %v214 = vpack.c.b16 %v206, %v206
    %v215 = vpack.c.b16 %v207, %v207
    %v216 = vpack.c.b16 %v208, %v208
    %v217 = vpack.c.b16 %v209, %v209
    %v218 = vpack.c.b16 %v210, %v210
    %v219 = vpack.c.b16 %v211, %v211
    %v220 = vpack.c.b16 %v212, %v212
    %v357 = vunpack.c.l.b16 %v73
    %v358 = vunpack.c.h.b16 %v73
    %v359 = vunpack.c.l.b16 %v74
    %v360 = vunpack.c.h.b16 %v74
    %v361 = vunpack.c.l.b16 %v75
    %v362 = vunpack.c.h.b16 %v75
    %v363 = vunpack.c.l.b16 %v76
    %v364 = vunpack.c.h.b16 %v76
    %v365 = vunpack.c.l.b16 %v77
    %v366 = vunpack.c.h.b16 %v77
    %v367 = vunpack.c.l.b16 %v78
    %v368 = vunpack.c.h.b16 %v78
    %v369 = vunpack.c.l.b16 %v79
    %v370 = vunpack.c.h.b16 %v79
    %v371 = vunpack.c.l.b16 %v80
    %v372 = vunpack.c.h.b16 %v80
    %v373 = vunpack.c.l.b16 %v81
    %v374 = vunpack.c.h.b16 %v81
    %v375 = vunpack.c.l.b16 %v82
    %v376 = vunpack.c.h.b16 %v82
    %v377 = vunpack.c.l.b16 %v83
    %v378 = vunpack.c.h.b16 %v83
    %v379 = vunpack.c.l.b16 %v84
    %v380 = vunpack.c.h.b16 %v84
    %v381 = vunpack.c.l.b16 %v85
    %v382 = vunpack.c.h.b16 %v85
    %v383 = vunpack.c.l.b16 %v86
    %v384 = vunpack.c.h.b16 %v86
    %v385 = vunpack.c.l.b16 %v87
    %v386 = vunpack.c.h.b16 %v87
    %v387 = vunpack.c.l.b16 %v88
    %v388 = vunpack.c.h.b16 %v88
    %v389 = vunpack.c.l.b16 %v89
    %v390 = vunpack.c.h.b16 %v89
    %v391 = vunpack.c.l.b16 %v90
    %v392 = vunpack.c.h.b16 %v90
    %v393 = vunpack.c.l.b16 %v91
    %v394 = vunpack.c.h.b16 %v91
    %v395 = vunpack.c.l.b16 %v92
    %v396 = vunpack.c.h.b16 %v92
    %v397 = vunpack.c.l.b16 %v93
    %v398 = vunpack.c.h.b16 %v93
    %v399 = vunpack.c.l.b16 %v94
    %v400 = vunpack.c.h.b16 %v94
    %v401 = vunpack.c.l.b16 %v95
    %v402 = vunpack.c.h.b16 %v95
    %v403 = vunpack.c.l.b16 %v96
    %v404 = vunpack.c.h.b16 %v96
    %v405 = vunpack.c.l.b16 %v97
    %v406 = vunpack.c.h.b16 %v97
    %v407 = vunpack.c.l.b16 %v98
    %v408 = vunpack.c.h.b16 %v98
    %v409 = vunpack.c.l.b16 %v99
    %v410 = vunpack.c.h.b16 %v99
    %v411 = vunpack.c.l.b16 %v100
    %v412 = vunpack.c.h.b16 %v100
    %v413 = vunpack.c.l.b16 %v101
    %v414 = vunpack.c.h.b16 %v101
    %v415 = vunpack.c.l.b16 %v102
    %v416 = vunpack.c.h.b16 %v102
    %v417 = vunpack.c.l.b16 %v103
    %v418 = vunpack.c.h.b16 %v103
    %v419 = vunpack.c.l.b16 %v104
    %v420 = vunpack.c.h.b16 %v104
    %v421 = vunpack.c.l.b16 %v105
    %v422 = vunpack.c.h.b16 %v105
    %v423 = vunpack.c.l.b16 %v106
    %v424 = vunpack.c.h.b16 %v106
    %v425 = vunpack.c.l.b16 %v107
    %v426 = vunpack.c.h.b16 %v107
    %v427 = vunpack.c.l.b16 %v108
    %v428 = vunpack.c.h.b16 %v108
    %v429 = vunpack.c.l.b16 %v109
    %v430 = vunpack.c.h.b16 %v109
    %v431 = vunpack.c.l.b16 %v110
    %v432 = vunpack.c.h.b16 %v110
    %v433 = vunpack.c.l.b16 %v111
    %v434 = vunpack.c.h.b16 %v111
    %v435 = vunpack.c.l.b16 %v112
    %v436 = vunpack.c.h.b16 %v112
    %v437 = vunpack.c.l.b16 %v113
    %v438 = vunpack.c.h.b16 %v113
    %v439 = vunpack.c.l.b16 %v114
    %v440 = vunpack.c.h.b16 %v114
    %v441 = vunpack.c.l.b16 %v115
    %v442 = vunpack.c.h.b16 %v115
    %v443 = vunpack.c.l.b16 %v116
    %v444 = vunpack.c.h.b16 %v116
    %v445 = vunpack.c.l.b16 %v117
    %v446 = vunpack.c.h.b16 %v117
    %v447 = vunpack.c.l.b16 %v118
    %v448 = vunpack.c.h.b16 %v118
    %v449 = vunpack.c.l.b16 %v119
    %v450 = vunpack.c.h.b16 %v119
    %v451 = vunpack.c.l.b16 %v120
    %v452 = vunpack.c.h.b16 %v120
    %v453 = vunpack.c.l.b16 %v121
    %v454 = vunpack.c.h.b16 %v121
    %v455 = vunpack.c.l.b16 %v122
    %v456 = vunpack.c.h.b16 %v122
    %v457 = vunpack.c.l.b16 %v123
    %v458 = vunpack.c.h.b16 %v123
    %v459 = vunpack.c.l.b16 %v124
    %v460 = vunpack.c.h.b16 %v124
    %v461 = vunpack.c.l.b16 %v125
    %v462 = vunpack.c.h.b16 %v125
    %v463 = vunpack.c.l.b16 %v126
    %v464 = vunpack.c.h.b16 %v126
    %v465 = vunpack.c.l.b16 %v127
    %v466 = vunpack.c.h.b16 %v127
    %v467 = vunpack.c.l.b16 %v128
    %v468 = vunpack.c.h.b16 %v128
    %v469 = vunpack.c.l.b16 %v129
    %v470 = vunpack.c.h.b16 %v129
    %v471 = vunpack.c.l.b16 %v130
    %v472 = vunpack.c.h.b16 %v130
    %v473 = vunpack.c.l.b16 %v131
    %v474 = vunpack.c.h.b16 %v131
    %v475 = vunpack.c.l.b16 %v132
    %v476 = vunpack.c.h.b16 %v132
    %v477 = vunpack.c.l.b16 %v133
    %v478 = vunpack.c.h.b16 %v133
    %v479 = vunpack.c.l.b16 %v134
    %v480 = vunpack.c.h.b16 %v134
    %v481 = vunpack.c.l.b16 %v135
    %v482 = vunpack.c.h.b16 %v135
    %v483 = vunpack.c.l.b16 %v136
    %v484 = vunpack.c.h.b16 %v136
    %v485 = vunpack.c.l.b16 %v137
    %v486 = vunpack.c.h.b16 %v137
    %v487 = vunpack.c.l.b16 %v138
    %v488 = vunpack.c.h.b16 %v138
    %v489 = vunpack.c.l.b16 %v139
    %v490 = vunpack.c.h.b16 %v139
    %v491 = vunpack.c.l.b16 %v140
    %v492 = vunpack.c.h.b16 %v140
    %v493 = vunpack.c.l.b16 %v141
    %v494 = vunpack.c.h.b16 %v141
    %v495 = vunpack.c.l.b16 %v142
    %v496 = vunpack.c.h.b16 %v142
    %v497 = vunpack.c.l.b16 %v143
    %v498 = vunpack.c.h.b16 %v143
    %v499 = vunpack.c.l.b16 %v144
    %v500 = vunpack.c.h.b16 %v144
    %v501 = vunpack.c.l.b16 %v145
    %v502 = vunpack.c.h.b16 %v145
    %v503 = vunpack.c.l.b16 %v146
    %v504 = vunpack.c.h.b16 %v146
    %v505 = vunpack.c.l.b16 %v147
    %v506 = vunpack.c.h.b16 %v147
    %v507 = vunpack.c.l.b16 %v148
    %v508 = vunpack.c.h.b16 %v148
    %v509 = vunpack.c.l.b16 %v149
    %v510 = vunpack.c.h.b16 %v149
    %v511 = vunpack.c.l.b16 %v150
    %v512 = vunpack.c.h.b16 %v150
    %v513 = vunpack.c.l.b16 %v151
    %v514 = vunpack.c.h.b16 %v151
    %v515 = vunpack.c.l.b16 %v152
    %v516 = vunpack.c.h.b16 %v152
    %v517 = vunpack.c.l.b16 %v153
    %v518 = vunpack.c.h.b16 %v153
    %v519 = vunpack.c.l.b16 %v154
    %v520 = vunpack.c.h.b16 %v154
    %v521 = vunpack.c.l.b16 %v155
    %v522 = vunpack.c.h.b16 %v155
    %v523 = vunpack.c.l.b16 %v156
    %v524 = vunpack.c.h.b16 %v156
    %v525 = vunpack.c.l.b16 %v157
    %v526 = vunpack.c.h.b16 %v157
    %v527 = vunpack.c.l.b16 %v158
    %v528 = vunpack.c.h.b16 %v158
    %v529 = vunpack.c.l.b16 %v159
    %v530 = vunpack.c.h.b16 %v159
    %v531 = vunpack.c.l.b16 %v160
    %v532 = vunpack.c.h.b16 %v160
    %v533 = vunpack.c.l.b16 %v161
    %v534 = vunpack.c.h.b16 %v161
    %v535 = vunpack.c.l.b16 %v162
    %v536 = vunpack.c.h.b16 %v162
    %v537 = vunpack.c.l.b16 %v163
    %v538 = vunpack.c.h.b16 %v163
    %v539 = vunpack.c.l.b16 %v164
    %v540 = vunpack.c.h.b16 %v164
    %v541 = vunpack.c.l.b16 %v165
    %v542 = vunpack.c.h.b16 %v165
    %v543 = vunpack.c.l.b16 %v166
    %v544 = vunpack.c.h.b16 %v166
    %v545 = vunpack.c.l.b16 %v167
    %v546 = vunpack.c.h.b16 %v167
    %v547 = vunpack.c.l.b16 %v168
    %v548 = vunpack.c.h.b16 %v168
    %v549 = vunpack.c.l.b16 %v169
    %v550 = vunpack.c.h.b16 %v169
    %v551 = vunpack.c.l.b16 %v170
    %v552 = vunpack.c.h.b16 %v170
    %v553 = vunpack.c.l.b16 %v171
    %v554 = vunpack.c.h.b16 %v171
    %v555 = vunpack.c.l.b16 %v172
    %v556 = vunpack.c.h.b16 %v172
    %v557 = vunpack.c.l.b16 %v173
    %v558 = vunpack.c.h.b16 %v173
    %v559 = vunpack.c.l.b16 %v174
    %v560 = vunpack.c.h.b16 %v174
    %v561 = vunpack.c.l.b16 %v175
    %v562 = vunpack.c.h.b16 %v175
    %v563 = vunpack.c.l.b16 %v176
    %v564 = vunpack.c.h.b16 %v176
    %v565 = vunpack.c.l.b16 %v177
    %v566 = vunpack.c.h.b16 %v177
    %v567 = vunpack.c.l.b16 %v178
    %v568 = vunpack.c.h.b16 %v178
    %v569 = vunpack.c.l.b16 %v179
    %v570 = vunpack.c.h.b16 %v179
    %v571 = vunpack.c.l.b16 %v180
    %v572 = vunpack.c.h.b16 %v180
    %v573 = vunpack.c.l.b16 %v181
    %v574 = vunpack.c.h.b16 %v181
    %v575 = vunpack.c.l.b16 %v182
    %v576 = vunpack.c.h.b16 %v182
    %v577 = vunpack.c.l.b16 %v183
    %v578 = vunpack.c.h.b16 %v183
    %v579 = vunpack.c.l.b16 %v184
    %v580 = vunpack.c.h.b16 %v184
    %v581 = vunpack.c.l.b16 %v185
    %v582 = vunpack.c.h.b16 %v185
    %v583 = vunpack.c.l.b16 %v186
    %v584 = vunpack.c.h.b16 %v186
    %v585 = vunpack.c.l.b16 %v187
    %v586 = vunpack.c.h.b16 %v187
    %v587 = vunpack.c.l.b16 %v188
    %v588 = vunpack.c.h.b16 %v188
    %v589 = vunpack.c.l.b16 %v189
    %v590 = vunpack.c.h.b16 %v189
    %v591 = vunpack.c.l.b16 %v190
    %v592 = vunpack.c.h.b16 %v190
    %v593 = vunpack.c.l.b16 %v191
    %v594 = vunpack.c.h.b16 %v191
    %v595 = vunpack.c.l.b16 %v192
    %v596 = vunpack.c.h.b16 %v192
    %v597 = vunpack.c.l.b16 %v193
    %v598 = vunpack.c.h.b16 %v193
    %v599 = vunpack.c.l.b16 %v194
    %v600 = vunpack.c.h.b16 %v194
    %v601 = vunpack.c.l.b16 %v195
    %v602 = vunpack.c.h.b16 %v195
    %v603 = vunpack.c.l.b16 %v196
    %v604 = vunpack.c.h.b16 %v196
    %v605 = vunpack.c.l.b16 %v197
    %v606 = vunpack.c.h.b16 %v197
    %v607 = vunpack.c.l.b16 %v198
    %v608 = vunpack.c.h.b16 %v198
    %v609 = vunpack.c.l.b16 %v199
    %v610 = vunpack.c.h.b16 %v199
    %v611 = vunpack.c.l.b16 %v200
    %v612 = vunpack.c.h.b16 %v200
    %v613 = vpack.c.b16 %v359, %v357
    %v614 = vpack.c.b16 %v360, %v358
    %v615 = vpack.c.b16 %v363, %v361
    %v616 = vpack.c.b16 %v364, %v362
    %v617 = vpack.c.b16 %v367, %v365
    %v618 = vpack.c.b16 %v368, %v366
    %v619 = vpack.c.b16 %v371, %v369
    %v620 = vpack.c.b16 %v372, %v370
    %v621 = vpack.c.b16 %v375, %v373
    %v622 = vpack.c.b16 %v376, %v374
    %v623 = vpack.c.b16 %v379, %v377
    %v624 = vpack.c.b16 %v380, %v378
    %v625 = vpack.c.b16 %v383, %v381
    %v626 = vpack.c.b16 %v384, %v382
    %v627 = vpack.c.b16 %v387, %v385
    %v628 = vpack.c.b16 %v388, %v386
    %v629 = vpack.c.b16 %v391, %v389
    %v630 = vpack.c.b16 %v392, %v390
    %v631 = vpack.c.b16 %v395, %v393
    %v632 = vpack.c.b16 %v396, %v394
    %v633 = vpack.c.b16 %v399, %v397
    %v634 = vpack.c.b16 %v400, %v398
    %v635 = vpack.c.b16 %v403, %v401
    %v636 = vpack.c.b16 %v404, %v402
    %v637 = vpack.c.b16 %v407, %v405
    %v638 = vpack.c.b16 %v408, %v406
    %v639 = vpack.c.b16 %v411, %v409
    %v640 = vpack.c.b16 %v412, %v410
    %v641 = vpack.c.b16 %v415, %v413
    %v642 = vpack.c.b16 %v416, %v414
    %v643 = vpack.c.b16 %v419, %v417
    %v644 = vpack.c.b16 %v420, %v418
    %v645 = vpack.c.b16 %v423, %v421
    %v646 = vpack.c.b16 %v424, %v422
    %v647 = vpack.c.b16 %v427, %v425
    %v648 = vpack.c.b16 %v428, %v426
    %v649 = vpack.c.b16 %v431, %v429
    %v650 = vpack.c.b16 %v432, %v430
    %v651 = vpack.c.b16 %v435, %v433
    %v652 = vpack.c.b16 %v436, %v434
    %v653 = vpack.c.b16 %v439, %v437
    %v654 = vpack.c.b16 %v440, %v438
    %v655 = vpack.c.b16 %v443, %v441
    %v656 = vpack.c.b16 %v444, %v442
    %v657 = vpack.c.b16 %v447, %v445
    %v658 = vpack.c.b16 %v448, %v446
    %v659 = vpack.c.b16 %v451, %v449
    %v660 = vpack.c.b16 %v452, %v450
    %v661 = vpack.c.b16 %v455, %v453
    %v662 = vpack.c.b16 %v456, %v454
    %v663 = vpack.c.b16 %v459, %v457
    %v664 = vpack.c.b16 %v460, %v458
    %v665 = vpack.c.b16 %v463, %v461
    %v666 = vpack.c.b16 %v464, %v462
    %v667 = vpack.c.b16 %v467, %v465
    %v668 = vpack.c.b16 %v468, %v466
    %v669 = vpack.c.b16 %v471, %v469
    %v670 = vpack.c.b16 %v472, %v470
    %v671 = vpack.c.b16 %v475, %v473
    %v672 = vpack.c.b16 %v476, %v474
    %v673 = vpack.c.b16 %v479, %v477
    %v674 = vpack.c.b16 %v480, %v478
    %v675 = vpack.c.b16 %v483, %v481
    %v676 = vpack.c.b16 %v484, %v482
    %v677 = vpack.c.b16 %v487, %v485
    %v678 = vpack.c.b16 %v488, %v486
    %v679 = vpack.c.b16 %v491, %v489
    %v680 = vpack.c.b16 %v492, %v490
    %v681 = vpack.c.b16 %v495, %v493
    %v682 = vpack.c.b16 %v496, %v494
    %v683 = vpack.c.b16 %v499, %v497
    %v684 = vpack.c.b16 %v500, %v498
    %v685 = vpack.c.b16 %v503, %v501
    %v686 = vpack.c.b16 %v504, %v502
    %v687 = vpack.c.b16 %v507, %v505
    %v688 = vpack.c.b16 %v508, %v506
    %v689 = vpack.c.b16 %v511, %v509
    %v690 = vpack.c.b16 %v512, %v510
    %v691 = vpack.c.b16 %v515, %v513
    %v692 = vpack.c.b16 %v516, %v514
    %v693 = vpack.c.b16 %v519, %v517
    %v694 = vpack.c.b16 %v520, %v518
    %v695 = vpack.c.b16 %v523, %v521
    %v696 = vpack.c.b16 %v524, %v522
    %v697 = vpack.c.b16 %v527, %v525
    %v698 = vpack.c.b16 %v528, %v526
    %v699 = vpack.c.b16 %v531, %v529
    %v700 = vpack.c.b16 %v532, %v530
    %v701 = vpack.c.b16 %v535, %v533
    %v702 = vpack.c.b16 %v536, %v534
    %v703 = vpack.c.b16 %v539, %v537
    %v704 = vpack.c.b16 %v540, %v538
    %v705 = vpack.c.b16 %v543, %v541
    %v706 = vpack.c.b16 %v544, %v542
    %v707 = vpack.c.b16 %v547, %v545
    %v708 = vpack.c.b16 %v548, %v546
    %v709 = vpack.c.b16 %v551, %v549
    %v710 = vpack.c.b16 %v552, %v550
    %v711 = vpack.c.b16 %v555, %v553
    %v712 = vpack.c.b16 %v556, %v554
    %v713 = vpack.c.b16 %v559, %v557
    %v714 = vpack.c.b16 %v560, %v558
    %v715 = vpack.c.b16 %v563, %v561
    %v716 = vpack.c.b16 %v564, %v562
    %v717 = vpack.c.b16 %v567, %v565
    %v718 = vpack.c.b16 %v568, %v566
    %v719 = vpack.c.b16 %v571, %v569
    %v720 = vpack.c.b16 %v572, %v570
    %v721 = vpack.c.b16 %v575, %v573
    %v722 = vpack.c.b16 %v576, %v574
    %v723 = vpack.c.b16 %v579, %v577
    %v724 = vpack.c.b16 %v580, %v578
    %v725 = vpack.c.b16 %v583, %v581
    %v726 = vpack.c.b16 %v584, %v582
    %v727 = vpack.c.b16 %v587, %v585
    %v728 = vpack.c.b16 %v588, %v586
    %v729 = vpack.c.b16 %v591, %v589
    %v730 = vpack.c.b16 %v592, %v590
    %v731 = vpack.c.b16 %v595, %v593
    %v732 = vpack.c.b16 %v596, %v594
    %v733 = vpack.c.b16 %v599, %v597
    %v734 = vpack.c.b16 %v600, %v598
    %v735 = vpack.c.b16 %v603, %v601
    %v736 = vpack.c.b16 %v604, %v602
    %v737 = vpack.c.b16 %v607, %v605
    %v738 = vpack.c.b16 %v608, %v606
    %v739 = vpack.c.b16 %v611, %v609
    %v740 = vpack.c.b16 %v612, %v610
    %869 = vmatpush.bf16.msra.mxu0 %v627
    %870 = vmatpush.bf16.msra.mxu0 %v625
    %871 = vmatpush.bf16.msra.mxu0 %v623
    %872 = vmatpush.bf16.msra.mxu0 %v621
    %873 = vmatpush.bf16.msra.mxu0 %v619
    %874 = vmatpush.bf16.msra.mxu0 %v617
    %875 = vmatpush.bf16.msra.mxu0 %v615
    %876 = vmatpush.bf16.msra.mxu0 %v613
    %877 = vmatmul.bf16.gmra.mxu0 %v213
    %v878 = vpop.f32.mrf.mxu0
    %v879 = vadd.f32 0.0, %v878
    %v880 = vpop.f32.mrf.mxu0
    %881 = vdwg.mxu0
    %882 = vmatpush.bf16.msra.mxu0 %v643
    %883 = vmatpush.bf16.msra.mxu0 %v641
    %884 = vmatpush.bf16.msra.mxu0 %v639
    %885 = vmatpush.bf16.msra.mxu0 %v637
    %886 = vmatpush.bf16.msra.mxu0 %v635
    %887 = vmatpush.bf16.msra.mxu0 %v633
    %888 = vmatpush.bf16.msra.mxu0 %v631
    %889 = vmatpush.bf16.msra.mxu0 %v629
    %890 = vmatmul.bf16.gmra.mxu0 %v214
    %v891 = vpop.f32.mrf.mxu0
    %v892 = vadd.f32 %v879, %v891
    %v893 = vpop.f32.mrf.mxu0
    %894 = vdwg.mxu0
    %895 = vmatpush.bf16.msra.mxu0 %v659
    %896 = vmatpush.bf16.msra.mxu0 %v657
    %897 = vmatpush.bf16.msra.mxu0 %v655
    %898 = vmatpush.bf16.msra.mxu0 %v653
    %899 = vmatpush.bf16.msra.mxu0 %v651
    %900 = vmatpush.bf16.msra.mxu0 %v649
    %901 = vmatpush.bf16.msra.mxu0 %v647
    %902 = vmatpush.bf16.msra.mxu0 %v645
    %903 = vmatmul.bf16.gmra.mxu0 %v215
    %v904 = vpop.f32.mrf.mxu0
    %v905 = vadd.f32 %v892, %v904
    %v906 = vpop.f32.mrf.mxu0
    %907 = vdwg.mxu0
    %908 = vmatpush.bf16.msra.mxu0 %v675
    %909 = vmatpush.bf16.msra.mxu0 %v673
    %910 = vmatpush.bf16.msra.mxu0 %v671
    %911 = vmatpush.bf16.msra.mxu0 %v669
    %912 = vmatpush.bf16.msra.mxu0 %v667
    %913 = vmatpush.bf16.msra.mxu0 %v665
    %914 = vmatpush.bf16.msra.mxu0 %v663
    %915 = vmatpush.bf16.msra.mxu0 %v661
    %916 = vmatmul.bf16.gmra.mxu0 %v216
    %v917 = vpop.f32.mrf.mxu0
    %v918 = vadd.f32 %v905, %v917
    %v919 = vpop.f32.mrf.mxu0
    %920 = vdwg.mxu0
    %921 = vmatpush.bf16.msra.mxu0 %v691
    %922 = vmatpush.bf16.msra.mxu0 %v689
    %923 = vmatpush.bf16.msra.mxu0 %v687
    %924 = vmatpush.bf16.msra.mxu0 %v685
    %925 = vmatpush.bf16.msra.mxu0 %v683
    %926 = vmatpush.bf16.msra.mxu0 %v681
    %927 = vmatpush.bf16.msra.mxu0 %v679
    %928 = vmatpush.bf16.msra.mxu0 %v677
    %929 = vmatmul.bf16.gmra.mxu0 %v217
    %v930 = vpop.f32.mrf.mxu0
    %v931 = vadd.f32 %v918, %v930
    %v932 = vpop.f32.mrf.mxu0
    %933 = vdwg.mxu0
    %934 = vmatpush.bf16.msra.mxu0 %v707
    %935 = vmatpush.bf16.msra.mxu0 %v705
    %936 = vmatpush.bf16.msra.mxu0 %v703
    %937 = vmatpush.bf16.msra.mxu0 %v701
    %938 = vmatpush.bf16.msra.mxu0 %v699
    %939 = vmatpush.bf16.msra.mxu0 %v697
    %940 = vmatpush.bf16.msra.mxu0 %v695
    %941 = vmatpush.bf16.msra.mxu0 %v693
    %942 = vmatmul.bf16.gmra.mxu0 %v218
    %v943 = vpop.f32.mrf.mxu0
    %v944 = vadd.f32 %v931, %v943
    %v945 = vpop.f32.mrf.mxu0
    %946 = vdwg.mxu0
    %947 = vmatpush.bf16.msra.mxu0 %v723
    %948 = vmatpush.bf16.msra.mxu0 %v721
    %949 = vmatpush.bf16.msra.mxu0 %v719
    %950 = vmatpush.bf16.msra.mxu0 %v717
    %951 = vmatpush.bf16.msra.mxu0 %v715
    %952 = vmatpush.bf16.msra.mxu0 %v713
    %953 = vmatpush.bf16.msra.mxu0 %v711
    %954 = vmatpush.bf16.msra.mxu0 %v709
    %955 = vmatmul.bf16.gmra.mxu0 %v219
    %v956 = vpop.f32.mrf.mxu0
    %v957 = vadd.f32 %v944, %v956
    %v958 = vpop.f32.mrf.mxu0
    %959 = vdwg.mxu0
    %960 = vmatpush.bf16.msra.mxu0 %v739
    %961 = vmatpush.bf16.msra.mxu0 %v737
    %962 = vmatpush.bf16.msra.mxu0 %v735
    %963 = vmatpush.bf16.msra.mxu0 %v733
    %964 = vmatpush.bf16.msra.mxu0 %v731
    %965 = vmatpush.bf16.msra.mxu0 %v729
    %966 = vmatpush.bf16.msra.mxu0 %v727
    %967 = vmatpush.bf16.msra.mxu0 %v725
    %968 = vmatmul.bf16.gmra.mxu0 %v220
    %v969 = vpop.f32.mrf.mxu0
    %v970 = vadd.f32 %v957, %v969
    %v971 = vpop.f32.mrf.mxu0
    %972 = vdwg.mxu0
    %973 = vmatpush.bf16.msra.mxu0 %v628
    %974 = vmatpush.bf16.msra.mxu0 %v626
    %975 = vmatpush.bf16.msra.mxu0 %v624
    %976 = vmatpush.bf16.msra.mxu0 %v622
    %977 = vmatpush.bf16.msra.mxu0 %v620
    %978 = vmatpush.bf16.msra.mxu0 %v618
    %979 = vmatpush.bf16.msra.mxu0 %v616
    %980 = vmatpush.bf16.msra.mxu0 %v614
    %981 = vmatmul.bf16.gmra.mxu0 %v213
    %v982 = vpop.f32.mrf.mxu0
    %v983 = vadd.f32 0.0, %v982
    %v984 = vpop.f32.mrf.mxu0
    %985 = vdwg.mxu0
    %986 = vmatpush.bf16.msra.mxu0 %v644
    %987 = vmatpush.bf16.msra.mxu0 %v642
    %988 = vmatpush.bf16.msra.mxu0 %v640
    %989 = vmatpush.bf16.msra.mxu0 %v638
    %990 = vmatpush.bf16.msra.mxu0 %v636
    %991 = vmatpush.bf16.msra.mxu0 %v634
    %992 = vmatpush.bf16.msra.mxu0 %v632
    %993 = vmatpush.bf16.msra.mxu0 %v630
    %994 = vmatmul.bf16.gmra.mxu0 %v214
    %v995 = vpop.f32.mrf.mxu0
    %v996 = vadd.f32 %v983, %v995
    %v997 = vpop.f32.mrf.mxu0
    %998 = vdwg.mxu0
    %999 = vmatpush.bf16.msra.mxu0 %v660
    %1000 = vmatpush.bf16.msra.mxu0 %v658
    %1001 = vmatpush.bf16.msra.mxu0 %v656
    %1002 = vmatpush.bf16.msra.mxu0 %v654
    %1003 = vmatpush.bf16.msra.mxu0 %v652
    %1004 = vmatpush.bf16.msra.mxu0 %v650
    %1005 = vmatpush.bf16.msra.mxu0 %v648
    %1006 = vmatpush.bf16.msra.mxu0 %v646
    %1007 = vmatmul.bf16.gmra.mxu0 %v215
    %v1008 = vpop.f32.mrf.mxu0
    %v1009 = vadd.f32 %v996, %v1008
    %v1010 = vpop.f32.mrf.mxu0
    %1011 = vdwg.mxu0
    %1012 = vmatpush.bf16.msra.mxu0 %v676
    %1013 = vmatpush.bf16.msra.mxu0 %v674
    %1014 = vmatpush.bf16.msra.mxu0 %v672
    %1015 = vmatpush.bf16.msra.mxu0 %v670
    %1016 = vmatpush.bf16.msra.mxu0 %v668
    %1017 = vmatpush.bf16.msra.mxu0 %v666
    %1018 = vmatpush.bf16.msra.mxu0 %v664
    %1019 = vmatpush.bf16.msra.mxu0 %v662
    %1020 = vmatmul.bf16.gmra.mxu0 %v216
    %v1021 = vpop.f32.mrf.mxu0
    %v1022 = vadd.f32 %v1009, %v1021
    %v1023 = vpop.f32.mrf.mxu0
    %1024 = vdwg.mxu0
    %1025 = vmatpush.bf16.msra.mxu0 %v692
    %1026 = vmatpush.bf16.msra.mxu0 %v690
    %1027 = vmatpush.bf16.msra.mxu0 %v688
    %1028 = vmatpush.bf16.msra.mxu0 %v686
    %1029 = vmatpush.bf16.msra.mxu0 %v684
    %1030 = vmatpush.bf16.msra.mxu0 %v682
    %1031 = vmatpush.bf16.msra.mxu0 %v680
    %1032 = vmatpush.bf16.msra.mxu0 %v678
    %1033 = vmatmul.bf16.gmra.mxu0 %v217
    %v1034 = vpop.f32.mrf.mxu0
    %v1035 = vadd.f32 %v1022, %v1034
    %v1036 = vpop.f32.mrf.mxu0
    %1037 = vdwg.mxu0
    %1038 = vmatpush.bf16.msra.mxu0 %v708
    %1039 = vmatpush.bf16.msra.mxu0 %v706
    %1040 = vmatpush.bf16.msra.mxu0 %v704
    %1041 = vmatpush.bf16.msra.mxu0 %v702
    %1042 = vmatpush.bf16.msra.mxu0 %v700
    %1043 = vmatpush.bf16.msra.mxu0 %v698
    %1044 = vmatpush.bf16.msra.mxu0 %v696
    %1045 = vmatpush.bf16.msra.mxu0 %v694
    %1046 = vmatmul.bf16.gmra.mxu0 %v218
    %v1047 = vpop.f32.mrf.mxu0
    %v1048 = vadd.f32 %v1035, %v1047
    %v1049 = vpop.f32.mrf.mxu0
    %1050 = vdwg.mxu0
    %1051 = vmatpush.bf16.msra.mxu0 %v724
    %1052 = vmatpush.bf16.msra.mxu0 %v722
    %1053 = vmatpush.bf16.msra.mxu0 %v720
    %1054 = vmatpush.bf16.msra.mxu0 %v718
    %1055 = vmatpush.bf16.msra.mxu0 %v716
    %1056 = vmatpush.bf16.msra.mxu0 %v714
    %1057 = vmatpush.bf16.msra.mxu0 %v712
    %1058 = vmatpush.bf16.msra.mxu0 %v710
    %1059 = vmatmul.bf16.gmra.mxu0 %v219
    %v1060 = vpop.f32.mrf.mxu0
    %v1061 = vadd.f32 %v1048, %v1060
    %v1062 = vpop.f32.mrf.mxu0
    %1063 = vdwg.mxu0
    %1064 = vmatpush.bf16.msra.mxu0 %v740
    %1065 = vmatpush.bf16.msra.mxu0 %v738
    %1066 = vmatpush.bf16.msra.mxu0 %v736
    %1067 = vmatpush.bf16.msra.mxu0 %v734
    %1068 = vmatpush.bf16.msra.mxu0 %v732
    %1069 = vmatpush.bf16.msra.mxu0 %v730
    %1070 = vmatpush.bf16.msra.mxu0 %v728
    %1071 = vmatpush.bf16.msra.mxu0 %v726
    %1072 = vmatmul.bf16.gmra.mxu0 %v220
    %v1073 = vpop.f32.mrf.mxu0
    %v1074 = vadd.f32 %v1061, %v1073
    %v1075 = vpop.f32.mrf.mxu0
    %1076 = vdwg.mxu0
    %v1077 = vadd.f32 %v67, %v970
    %v1078 = vadd.f32 %v68, %v1074
    %1079 = vst [vmem:[#allocation2] sm:$0xff] %v1077
    %1080 = vst [vmem:[#allocation2 + $0x8] sm:$0xff] %v1078
    // Predicated region
    $region30: #{tpu_custom_call.1} parent=1 // pred_check
      %p1081 = pneg %p61
    $region31: #{tpu_custom_call.1} parent=1 // pred_check_branch
      %1083 = sbr.rel (%p1081) target = $region33
    $region32: #{tpu_custom_call.1} parent=1 // pred_region
      %v1084 = vld [vmem:[#allocation2] sm:$0xff]
      %v1085 = vld [vmem:[#allocation2 + $0x8] sm:$0xff]
      %v1086 = vmul.f32 %v1084, 0.0625
      %v1087 = vmul.f32 %v1085, 0.0625
      %v1088 = vmul.f32 %v1086, %v1086
      %v1089 = vmul.f32 %v1087, %v1087
      %vm1090 = vcmask 1041408
      %v1091 = vsel %vm1090, %v1088, 0.0
      %v1092 = vsel %vm1090, %v1089, 0.0
      %v1093 = vadd.f32 %v1091, %v1092
      %1094 = vadd.xlane.f32.xlu0 %v1093
      %v1095 = vpop.xlane.xlu0 %1094
      %v1096 = vmul.f32 %v1095, 0.125
      %v1097 = vrsqrt.pop %v1096
      %v1098 = vmul.f32 %v1097, %v1096
      %v1099 = vmul.f32 %v1098, %v1097
      %v1100 = vmul.f32 0.5, %v1099
      %v1101 = vsub.f32 1.5, %v1100
      %v1102 = vmul.f32 %v1097, %v1101
      %v1103 = vmul.f32 %v1096, %v1102
      %vm1104 = vcmp.eq.f32.partialorder %v1096, inf
      %v1105 = vsel %vm1104, %v1096, %v1103
      %vm1106 = vcmp.eq.f32.partialorder %v1096, 0.0
      %v1107 = vand.u32 %v1096, 2147483648
      %v1108 = vsel %vm1106, %v1107, %v1105
      %vm1109 = vcmask 1024
      %v1110 = vsel %vm1109, %v1108, 0.0
      %1111 = vadd.xlane.f32.xlu0 %v1110
      %v1112 = vpop.xlane.xlu0 %1111
      %v1113 = vrot.slane %v1112, 4
      %v1114 = vadd.f32 %v1112, %v1113
      %v1115 = vrot.slane %v1114, 2
      %v1116 = vadd.f32 %v1114, %v1115
      %v1117 = vrot.slane %v1116, 1
      %v1118 = vadd.f32 %v1116, %v1117
      %s1119 = vtos %v1118
      %v1120 = vstv %s1119
      %v1121 = vrcp.pop 2.0
      %v1122 = vmul.f32 2.0, %v1121
      %v1123 = vsub.f32 1.0, %v1122
      %v1124 = vmul.f32 %v1121, %v1123
      %v1125 = vadd.f32 %v1121, %v1124
      %vm1126 = vweird.f32 %v1121
      %v1127 = vsel %vm1126, %v1121, %v1125
      %v1128 = vmul.f32 %v1120, %v1127
      %vm1129 = vcmask 0
      %1130 = vst.msk [vmem:[#allocation11] sm:$0x1] %vm1129, %v1128
      %s1131 = sld [smem:[#allocation3]]
      %v1132 = vstv %s1131
      %v1133 = vsub.f32 %v1108, %v1132
      %v1134 = vmul.f32 %v1133, %v1133
      %v1135 = vsel %vm1109, %v1134, 0.0
      %1136 = vadd.xlane.f32.xlu0 %v1135
      %v1137 = vpop.xlane.xlu0 %1136
      %v1138 = vrot.slane %v1137, 4
      %v1139 = vadd.f32 %v1137, %v1138
      %v1140 = vrot.slane %v1139, 2
      %v1141 = vadd.f32 %v1139, %v1140
      %v1142 = vrot.slane %v1141, 1
      %v1143 = vadd.f32 %v1141, %v1142
      %s1144 = vtos %v1143
      %v1145 = vstv %s1144
      %v1146 = vmul.f32 %v1145, %v1127
      %s1147 = sld [smem:[#allocation3 + $0x1]]
      %p1148 = scmp.gt.f32.partialorder %s1147, 0.0
      %s1149 = scalar_select %p1148, 1, 0
      %v1150 = vstv %s1149
      %vm1151 = vcmp.eq.s32.totalorder %v1150, 1
      %v1152 = vsel %vm1151, %v1146, 0.0
      %1153 = vst.msk [vmem:[#allocation10] sm:$0x1] %vm1129, %v1152
    $region33: #{tpu_custom_call.1} parent=1 // pred_fallthru
      _
    // Predicated region
    $region34: #{tpu_custom_call.1} parent=1 // pred_check
      _
    $region35: #{tpu_custom_call.1} parent=1 // pred_check_branch
      %1155 = sbr.rel (0) target = $region37
    $region36: #{tpu_custom_call.1} parent=1 // pred_region
      %1157 = vsyncadd [#allocation5], 0
      %s1159 = sshll.u32 [#allocation10], 4
      %s1160 = int_to_ptr.vmem [resolvable:$true] %s1159
      %s1161 = sshll.u32 %s3, 4
      %s1162 = int_to_ptr.hbm [resolvable:$true] %s1161
      %1164 = dma.vmem_to_hbm [thread:$0]  %s1160, 16, %s1162, [#allocation5]
    $region37: #{tpu_custom_call.1} parent=1 // pred_fallthru
      _
    // Predicated region
    $region38: #{tpu_custom_call.1} parent=1 // pred_check
      _
    $region39: #{tpu_custom_call.1} parent=1 // pred_check_branch
      %1166 = sbr.rel (0) target = $region41
    $region40: #{tpu_custom_call.1} parent=1 // pred_region
      %1168 = vsyncadd [#allocation12], 0
      %s1170 = sshll.u32 [#allocation11], 4
      %s1171 = int_to_ptr.vmem [resolvable:$true] %s1170
      %s1172 = sshll.u32 %s4, 4
      %s1173 = int_to_ptr.hbm [resolvable:$true] %s1172
      %1175 = dma.vmem_to_hbm [thread:$0]  %s1171, 16, %s1173, [#allocation12]
    $region41: #{tpu_custom_call.1} parent=1 // pred_fallthru
      _
    // Predicated region
    $region42: #{tpu_custom_call.1} parent=1 // pred_check
      _
    $region43: #{tpu_custom_call.1} parent=1 // pred_check_branch
      %1177 = sbr.rel (0) target = $region45
    $region44: #{tpu_custom_call.1} parent=1 // pred_region
      %1179 = dma.done [#allocation5], 16
    $region45: #{tpu_custom_call.1} parent=1 // pred_fallthru
      _
    // Predicated region
    $region46: #{tpu_custom_call.1} parent=1 // pred_check
      _
    $region47: #{tpu_custom_call.1} parent=1 // pred_check_branch
      %1181 = sbr.rel (0) target = $region49
    $region48: #{tpu_custom_call.1} parent=1 // pred_region
      %1183 = dma.done [#allocation12], 16
    $region49: #{tpu_custom_call.1} parent=1 // pred_fallthru
      _
    %1184 = vsyncpa [#allocation4], 1
    %1185 = vsyncpa [#allocation9], 1
    %1186 = vsyncpa [#allocation5], 1
    %1187 = vsyncpa [#allocation12], 1
    %1188 = vsyncpa [#allocation6], 1

</llo_original>
